<compile_context>
chip_gen: v7x
topology: tpu7x:2x2x1
jax: 0.10.0
libtpu: 0.0.40
codegen_flags: <defaults>
</compile_context>

<pallas_src>
import math

import jax
import jax.numpy as jnp
from jax.experimental import pallas as pl
from jax.experimental.pallas import tpu as pltpu


def _round_up(x, m):
    return ((x + m - 1) // m) * m


def _sigmoid_kernel(z):
    # Numerically stable logistic: exp runs on the EUP, the divide is an approximate
    # EUP reciprocal, so the whole thing stays off the VALU slots.
    e = jnp.exp(-jnp.abs(z))
    r = pl.reciprocal(1.0 + e, approx=True)
    return jnp.where(z >= 0.0, r, e * r)


def _make_gen_message_kernel(n_mlp_layers, node_dim):
    def kernel(*refs):
        # refs = (ei, vs, wA_0, bA_0, ..., wA_{L-1}, bA_{L-1}, wBC, bBC, out)
        ei_ref, vs_ref = refs[0], refs[1]
        o_ref = refs[-1]
        p = refs[2:-1]

        # --- MLP over edge features: bf16 MXU operands, f32 accumulate / epilogue ---
        x = ei_ref[...]
        if x.dtype != jnp.bfloat16:
            x = x.astype(jnp.bfloat16)
        for l in range(n_mlp_layers):
            w_ref, b_ref = p[2 * l], p[2 * l + 1]
            h = jnp.dot(x, w_ref[...], preferred_element_type=jnp.float32) + b_ref[...]
            if l < n_mlp_layers - 1:
                h = jnp.maximum(h, 0.2 * h)          # LeakyReLU(0.2): one VALU op
            x = h.astype(jnp.bfloat16)               # next matmul's LHS

        # --- Fused B|C head: one [E, 2N] matmul, then static lane-aligned split ---
        wbc_ref, bbc_ref = p[2 * n_mlp_layers], p[2 * n_mlp_layers + 1]
        y = jnp.dot(x, wbc_ref[...], preferred_element_type=jnp.float32) + bbc_ref[...]
        scale = _sigmoid_kernel(y[:, :node_dim])
        shift = y[:, node_dim:]

        msg = scale * vs_ref[...].astype(jnp.float32) + shift
        o_ref[...] = msg.astype(o_ref.dtype)

    return kernel


def _choose_tiling(M, tm_max):
    """Pick (tm, Mp): row tile and padded row count, with Mp % tm == 0."""
    if M <= tm_max:
        if M % 16 == 0 and M >= 16:
            return M // 2, M      # >= 2 grid steps so both v7x TensorCores get rows
        return M, M               # block == full dim: no 8-row alignment required
    # Large M: pad to a multiple of 256 (<= 255 extra rows, sliced off afterwards)
    # and pick the largest multiple-of-8 tile <= tm_max that divides evenly.
    Mp = _round_up(M, 256)
    tm = tm_max
    while Mp % tm != 0:
        tm -= 8                   # terminates by tm == 256 since 256 | Mp
    return tm, Mp


def gen_message(Ei, Vs, mlp_params, wB, bB, wC, bC, *, edge_feature=True, tm_max=2048):
    """Ei: [M, E]; Vs: [M, N]; mlp_params: list of (w [E,E], b [1,E]) with weights
    pre-transposed to [in, out]; wB/wC: [E, N]; bB/bC: [1, N].  Returns msg [M, N]
    in Vs.dtype."""
    if not edge_feature:
        return Vs  # forward() returns Vs unchanged when edge features are disabled

    M, E = Ei.shape
    Mv, N = Vs.shape
    assert M == Mv, "Ei and Vs must have the same number of rows"

    # bf16 MXU operands: stream Ei in bf16, pre-cast weights once.  Callers that
    # already hold bf16 activations (and bf16 Vs) avoid the extra cast pass and
    # halve the streamed bytes end-to-end.
    if Ei.dtype != jnp.bfloat16:
        Ei = Ei.astype(jnp.bfloat16)

    wBC = jnp.concatenate([wB, wC], axis=1).astype(jnp.bfloat16)   # [E, 2N]
    bBC = jnp.concatenate([bB, bC], axis=1).astype(jnp.float32)    # [1, 2N]
    flat_params = []
    for w, b in mlp_params:
        flat_params += [w.astype(jnp.bfloat16), b.astype(jnp.float32)]
    flat_params += [wBC, bBC]
    n_mlp = len(mlp_params)

    tm, Mp = _choose_tiling(M, tm_max)
    if Mp != M:
        Ei = jnp.pad(Ei, ((0, Mp - M), (0, 0)))
        Vs = jnp.pad(Vs, ((0, Mp - M), (0, 0)))

    row_spec_E = pl.BlockSpec((tm, E), lambda i: (i, 0))
    row_spec_N = pl.BlockSpec((tm, N), lambda i: (i, 0))

    def resident(shape):  # weights/biases: constant block index -> stay VMEM-resident
        return pl.BlockSpec(shape, lambda i: (0, 0))

    in_specs = [row_spec_E, row_spec_N] + [resident(p.shape) for p in flat_params]

    vb = jnp.dtype(Vs.dtype).itemsize
    flops = 2 * Mp * E * E * n_mlp + 2 * Mp * E * (2 * N) + 6 * Mp * N
    bytes_accessed = (Mp * E * 2                      # Ei stream (bf16)
                      + 2 * Mp * N * vb               # Vs in + msg out
                      + 2 * (n_mlp * E * E + 2 * E * N)   # bf16 weights
                      + 4 * (n_mlp * E + 2 * N))          # f32 biases
    cost = pl.CostEstimate(flops=flops, transcendentals=2 * Mp * N,
                           bytes_accessed=bytes_accessed)

    out = pl.pallas_call(
        _make_gen_message_kernel(n_mlp, N),
        out_shape=jax.ShapeDtypeStruct((Mp, N), Vs.dtype),
        grid=(Mp // tm,),
        in_specs=in_specs,
        out_specs=row_spec_N,
        compiler_params=pltpu.CompilerParams(
            dimension_semantics=("parallel",)),
        cost_estimate=cost,
    )(Ei, Vs, *flat_params)
    return out[:M] if Mp != M else out


def _linear_init(key, fan_in, fan_out):
    """Deterministic init mimicking nn.Linear: U(-1/sqrt(fan_in), 1/sqrt(fan_in)).
    Weight returned pre-transposed to [in, out], bias as [1, out]."""
    k_w, k_b = jax.random.split(key)
    bound = 1.0 / math.sqrt(fan_in)
    w = jax.random.uniform(k_w, (fan_in, fan_out), jnp.float32, -bound, bound)
    b = jax.random.uniform(k_b, (1, fan_out), jnp.float32, -bound, bound)
    return w, b


def gen_message_ref(Ei, Vs, mlp_params, wB, bB, wC, bC, edge_feature=True):
    """Pure-JAX reference mirroring the kernel's bf16-operand / f32-accumulate math."""
    if not edge_feature:
        return Vs
    x = Ei.astype(jnp.bfloat16)
    n = len(mlp_params)
    for l, (w, b) in enumerate(mlp_params):
        h = jnp.dot(x, w.astype(jnp.bfloat16),
                    preferred_element_type=jnp.float32) + b
        if l < n - 1:
            h = jnp.maximum(h, 0.2 * h)
        x = h.astype(jnp.bfloat16)
    scale = jax.nn.sigmoid(jnp.dot(x, wB.astype(jnp.bfloat16),
                                   preferred_element_type=jnp.float32) + bB)
    shift = jnp.dot(x, wC.astype(jnp.bfloat16),
                    preferred_element_type=jnp.float32) + bC
    return (scale * Vs.astype(jnp.float32) + shift).astype(Vs.dtype)


if __name__ == "__main__":
    batch, num_edges = 2, 8
    edge_dim, node_dim = 128, 128   # lane-dense last dim (multiple of 128)
    nb_mlp_layer = 2                # MLP((edge_dim,) * (nb_mlp_layer + 1))

    key = jax.random.PRNGKey(0)
    k_vs, k_vt, k_ei, k_p = jax.random.split(key, 4)

    Vs = jax.random.normal(k_vs, (batch, num_edges, node_dim), jnp.float32)
    Vt = jax.random.normal(k_vt, (batch, num_edges, node_dim), jnp.float32)  # unused by forward
    Ei = jax.random.normal(k_ei, (batch, num_edges, edge_dim), jnp.float32)

    pkeys = jax.random.split(k_p, nb_mlp_layer + 2)
    mlp_params = [_linear_init(pkeys[l], edge_dim, edge_dim)
                  for l in range(nb_mlp_layer)]
    wB, bB = _linear_init(pkeys[nb_mlp_layer], edge_dim, node_dim)
    wC, bC = _linear_init(pkeys[nb_mlp_layer + 1], edge_dim, node_dim)

    # Glue: flatten leading dims into M for the kernel, reshape back after.
    M = batch * num_edges
    Ei2 = Ei.reshape(M, edge_dim)
    Vs2 = Vs.reshape(M, node_dim)

    out2 = gen_message(Ei2, Vs2, mlp_params, wB, bB, wC, bC, edge_feature=True)
    out = out2.reshape(batch, num_edges, node_dim)
    jax.block_until_ready(out)

    ref = gen_message_ref(Ei2, Vs2, mlp_params, wB, bB, wC, bC).reshape(
        batch, num_edges, node_dim)
    # bf16 matmul operands on both sides; only the approx-reciprocal sigmoid differs.
    assert jnp.allclose(out, ref, atol=1e-2, rtol=1e-2), "mismatch vs reference"

    print("KERNEL_OK")
</pallas_src>

<mosaic_0001>
module attributes {stable_mosaic.version = 11 : i64} {
  func.func @kernel(%arg0: i32, %arg1: memref<8x128xbf16, #tpu.memory_space<vmem>>, %arg2: memref<8x128xf32, #tpu.memory_space<vmem>>, %arg3: memref<128x128xbf16, #tpu.memory_space<vmem>>, %arg4: memref<1x128xf32, #tpu.memory_space<vmem>>, %arg5: memref<128x128xbf16, #tpu.memory_space<vmem>>, %arg6: memref<1x128xf32, #tpu.memory_space<vmem>>, %arg7: memref<128x256xbf16, #tpu.memory_space<vmem>>, %arg8: memref<1x256xf32, #tpu.memory_space<vmem>>, %arg9: memref<8x128xf32, #tpu.memory_space<vmem>>) attributes {dimension_semantics = [#tpu.dimension_semantics<parallel>], iteration_bounds = array<i64: 2>, scalar_prefetch = 0 : i64, scratch_operands = 0 : i64, tpu.core_type = #tpu.core_type<tc>, window_params = [{transform_indices = @transform_0, window_bounds = array<i64: 8, 128>}, {transform_indices = @transform_1, window_bounds = array<i64: 8, 128>}, {pipeline_mode = #tpu.pipeline_mode<synchronous>, transform_indices = @transform_2, window_bounds = array<i64: 128, 128>}, {pipeline_mode = #tpu.pipeline_mode<synchronous>, transform_indices = @transform_3, window_bounds = array<i64: 1, 128>}, {pipeline_mode = #tpu.pipeline_mode<synchronous>, transform_indices = @transform_4, window_bounds = array<i64: 128, 128>}, {pipeline_mode = #tpu.pipeline_mode<synchronous>, transform_indices = @transform_5, window_bounds = array<i64: 1, 128>}, {pipeline_mode = #tpu.pipeline_mode<synchronous>, transform_indices = @transform_6, window_bounds = array<i64: 128, 256>}, {pipeline_mode = #tpu.pipeline_mode<synchronous>, transform_indices = @transform_7, window_bounds = array<i64: 1, 256>}, {transform_indices = @transform_8, window_bounds = array<i64: 8, 128>}]} {
    %c0 = arith.constant 0 : index
    %c0_0 = arith.constant 0 : index
    %0 = vector.load %arg1[%c0, %c0_0] : memref<8x128xbf16, #tpu.memory_space<vmem>>, vector<8x128xbf16>
    %c0_1 = arith.constant 0 : index
    %c0_2 = arith.constant 0 : index
    %1 = vector.load %arg3[%c0_1, %c0_2] : memref<128x128xbf16, #tpu.memory_space<vmem>>, vector<128x128xbf16>
    %cst = arith.constant dense<0.000000e+00> : vector<8x128xf32>
    %2 = tpu.matmul %0, %1, %cst {dimension_numbers = #tpu.dot_dimension_numbers<[1], [0], [0], [1], [0, 0, 1, 1], [], []>} : vector<8x128xbf16>, vector<128x128xbf16>, vector<8x128xf32> -> vector<8x128xf32>
    %c0_3 = arith.constant 0 : index
    %c0_4 = arith.constant 0 : index
    %3 = vector.load %arg4[%c0_3, %c0_4] : memref<1x128xf32, #tpu.memory_space<vmem>>, vector<1x128xf32>
    %4 = vector.broadcast %3 : vector<1x128xf32> to vector<8x128xf32>
    %5 = arith.addf %2, %4 : vector<8x128xf32>
    %cst_5 = arith.constant 2.000000e-01 : f32
    %6 = vector.broadcast %cst_5 : f32 to vector<8x128xf32>
    %7 = arith.mulf %6, %5 : vector<8x128xf32>
    %8 = arith.maximumf %5, %7 : vector<8x128xf32>
    %9 = arith.truncf %8 : vector<8x128xf32> to vector<8x128xbf16>
    %c0_6 = arith.constant 0 : index
    %c0_7 = arith.constant 0 : index
    %10 = vector.load %arg5[%c0_6, %c0_7] : memref<128x128xbf16, #tpu.memory_space<vmem>>, vector<128x128xbf16>
    %cst_8 = arith.constant dense<0.000000e+00> : vector<8x128xf32>
    %11 = tpu.matmul %9, %10, %cst_8 {dimension_numbers = #tpu.dot_dimension_numbers<[1], [0], [0], [1], [0, 0, 1, 1], [], []>} : vector<8x128xbf16>, vector<128x128xbf16>, vector<8x128xf32> -> vector<8x128xf32>
    %c0_9 = arith.constant 0 : index
    %c0_10 = arith.constant 0 : index
    %12 = vector.load %arg6[%c0_9, %c0_10] : memref<1x128xf32, #tpu.memory_space<vmem>>, vector<1x128xf32>
    %13 = vector.broadcast %12 : vector<1x128xf32> to vector<8x128xf32>
    %14 = arith.addf %11, %13 : vector<8x128xf32>
    %15 = arith.truncf %14 : vector<8x128xf32> to vector<8x128xbf16>
    %c0_11 = arith.constant 0 : index
    %c0_12 = arith.constant 0 : index
    %16 = vector.load %arg7[%c0_11, %c0_12] : memref<128x256xbf16, #tpu.memory_space<vmem>>, vector<128x256xbf16>
    %cst_13 = arith.constant dense<0.000000e+00> : vector<8x256xf32>
    %17 = tpu.matmul %15, %16, %cst_13 {dimension_numbers = #tpu.dot_dimension_numbers<[1], [0], [0], [1], [0, 0, 1, 1], [], []>} : vector<8x128xbf16>, vector<128x256xbf16>, vector<8x256xf32> -> vector<8x256xf32>
    %c0_14 = arith.constant 0 : index
    %c0_15 = arith.constant 0 : index
    %18 = vector.load %arg8[%c0_14, %c0_15] : memref<1x256xf32, #tpu.memory_space<vmem>>, vector<1x256xf32>
    %19 = vector.broadcast %18 : vector<1x256xf32> to vector<8x256xf32>
    %20 = arith.addf %17, %19 : vector<8x256xf32>
    %21 = vector.extract_strided_slice %20 {offsets = [0, 0], sizes = [8, 128], strides = [1, 1]} : vector<8x256xf32> to vector<8x128xf32>
    %22 = math.absf %21 : vector<8x128xf32>
    %cst_16 = arith.constant 0.000000e+00 : f32
    %23 = vector.broadcast %cst_16 : f32 to vector<8x128xf32>
    %24 = arith.subf %23, %22 : vector<8x128xf32>
    %25 = math.exp %24 : vector<8x128xf32>
    %cst_17 = arith.constant 1.000000e+00 : f32
    %26 = vector.broadcast %cst_17 : f32 to vector<8x128xf32>
    %27 = arith.addf %26, %25 : vector<8x128xf32>
    %28 = tpu.reciprocal %27 {approx = true} : vector<8x128xf32> -> vector<8x128xf32>
    %cst_18 = arith.constant 0.000000e+00 : f32
    %29 = vector.broadcast %cst_18 : f32 to vector<8x128xf32>
    %30 = arith.cmpf oge, %21, %29 : vector<8x128xf32>
    %31 = arith.mulf %25, %28 : vector<8x128xf32>
    %32 = arith.select %30, %28, %31 : vector<8x128xi1>, vector<8x128xf32>
    %33 = vector.extract_strided_slice %20 {offsets = [0, 128], sizes = [8, 128], strides = [1, 1]} : vector<8x256xf32> to vector<8x128xf32>
    %c0_19 = arith.constant 0 : index
    %c0_20 = arith.constant 0 : index
    %34 = vector.load %arg2[%c0_19, %c0_20] : memref<8x128xf32, #tpu.memory_space<vmem>>, vector<8x128xf32>
    %35 = arith.mulf %32, %34 : vector<8x128xf32>
    %36 = arith.addf %35, %33 : vector<8x128xf32>
    %c0_21 = arith.constant 0 : index
    %c0_22 = arith.constant 0 : index
    %37 = vector.load %arg9[%c0_21, %c0_22] : memref<8x128xf32, #tpu.memory_space<vmem>>, vector<8x128xf32>
    tpu.vector_store %arg9[%c0_21, %c0_22], %36 {strides = array<i32>} : memref<8x128xf32, #tpu.memory_space<vmem>>, vector<8x128xf32>,
    return
  }
  func.func @transform_0(%arg0: i32) -> (i32, i32) {
    %c0_i32 = arith.constant 0 : i32
    %c0_i32_0 = arith.constant 0 : i32
    return %arg0, %c0_i32 : i32, i32
  }
  func.func @transform_1(%arg0: i32) -> (i32, i32) {
    %c0_i32 = arith.constant 0 : i32
    %c0_i32_0 = arith.constant 0 : i32
    return %arg0, %c0_i32 : i32, i32
  }
  func.func @transform_2(%arg0: i32) -> (i32, i32) {
    %c0_i32 = arith.constant 0 : i32
    %c0_i32_0 = arith.constant 0 : i32
    %c0_i32_1 = arith.constant 0 : i32
    return %c0_i32, %c0_i32_0 : i32, i32
  }
  func.func @transform_3(%arg0: i32) -> (i32, i32) {
    %c0_i32 = arith.constant 0 : i32
    %c0_i32_0 = arith.constant 0 : i32
    %c0_i32_1 = arith.constant 0 : i32
    return %c0_i32, %c0_i32_0 : i32, i32
  }
  func.func @transform_4(%arg0: i32) -> (i32, i32) {
    %c0_i32 = arith.constant 0 : i32
    %c0_i32_0 = arith.constant 0 : i32
    %c0_i32_1 = arith.constant 0 : i32
    return %c0_i32, %c0_i32_0 : i32, i32
  }
  func.func @transform_5(%arg0: i32) -> (i32, i32) {
    %c0_i32 = arith.constant 0 : i32
    %c0_i32_0 = arith.constant 0 : i32
    %c0_i32_1 = arith.constant 0 : i32
    return %c0_i32, %c0_i32_0 : i32, i32
  }
  func.func @transform_6(%arg0: i32) -> (i32, i32) {
    %c0_i32 = arith.constant 0 : i32
    %c0_i32_0 = arith.constant 0 : i32
    %c0_i32_1 = arith.constant 0 : i32
    return %c0_i32, %c0_i32_0 : i32, i32
  }
  func.func @transform_7(%arg0: i32) -> (i32, i32) {
    %c0_i32 = arith.constant 0 : i32
    %c0_i32_0 = arith.constant 0 : i32
    %c0_i32_1 = arith.constant 0 : i32
    return %c0_i32, %c0_i32_0 : i32, i32
  }
  func.func @transform_8(%arg0: i32) -> (i32, i32) {
    %c0_i32 = arith.constant 0 : i32
    %c0_i32_0 = arith.constant 0 : i32
    return %arg0, %c0_i32 : i32, i32
  }
}

</mosaic_0001>

<llo_original>
// kernel: tpu_custom_call.1
$region0: #{tpu_custom_call.1}
  #allocation0 [shape = 'u32[]', space=smem, size = 0x4, offset = 0x4, fixed_abs, tag = 'smem constant byte address 0x4 - core index']
  #allocation1 [shape = 'u32[144,128]{1,0:T(1,128)}', space=vmem, size = 0x12000, scoped, tag = 'internal scratch']
  %s0 = inlined_call_operand.hbm [shape: bf16[16,128], index: 0, kind: input, shape index: {}]
  %s1 = inlined_call_operand.hbm [shape: f32[16,128], index: 1, kind: input, shape index: {}]
  %s2 = inlined_call_operand.hbm [shape: bf16[128,128], index: 2, kind: input, shape index: {}]
  %s3 = inlined_call_operand.vmem [shape: f32[1,128], index: 3, kind: input, shape index: {}]
  %s4 = inlined_call_operand.hbm [shape: bf16[128,128], index: 4, kind: input, shape index: {}]
  %s5 = inlined_call_operand.vmem [shape: f32[1,128], index: 5, kind: input, shape index: {}]
  %s6 = inlined_call_operand.hbm [shape: bf16[128,256], index: 6, kind: input, shape index: {}]
  %s7 = inlined_call_operand.vmem [shape: f32[1,256], index: 7, kind: input, shape index: {}]
  %s8 = inlined_call_operand.hbm [shape: f32[16,128], index: 8, kind: output, shape index: {}]
  %s9 = sld [smem:[#allocation0]]
  $region85: #{tpu_custom_call.1} parent=0
    _
  %s11 = ssub.s32 1, %s9
  %s12 = scalar_select 0, %s11, %s9
  $region1: #{tpu_custom_call.1} parent=0
    #allocation2 [shape = 'u8[4096]{0}', space=vmem, size = 0x1000, scoped, tag = 'input window, operand 0']
    #allocation3 [shape = 's32[2]{0}', space=sflag, size = 0x8, scoped, tag = 'scoped memory for tpu_custom_call.1']
    #allocation4 [shape = 's32[2]{0}', space=sflag, size = 0x8, scoped, tag = 'scoped memory for tpu_custom_call.1']
    #allocation5 [shape = 'u8[8192]{0}', space=vmem, size = 0x2000, scoped, tag = 'input window, operand 1']
    #allocation6 [shape = 's32[2]{0}', space=sflag, size = 0x8, scoped, tag = 'scoped memory for tpu_custom_call.1']
    #allocation7 [shape = 'u8[32768]{0}', space=vmem, size = 0x8000, scoped, tag = 'input window, operand 2, single buffered']
    #allocation8 [shape = 'u8[32768]{0}', space=vmem, size = 0x8000, scoped, tag = 'input window, operand 4, single buffered']
    #allocation9 [shape = 's32[1]{0}', space=sflag, size = 0x4, scoped, tag = 'scoped memory for tpu_custom_call.1']
    #allocation10 [shape = 'u8[65536]{0}', space=vmem, size = 0x10000, scoped, tag = 'input window, operand 6, single buffered']
    #allocation11 [shape = 'u8[8192]{0}', space=vmem, size = 0x2000, scoped, tag = 'output window, operand 0']
    %13 = vsyncpa [#allocation3], 0
    %s14 = scalar_lea.sflag [#allocation3], 1
    %15 = vsyncpa %s14, 0
    %16 = vsyncpa [#allocation6], 0
    %s17 = scalar_lea.sflag [#allocation6], 1
    %18 = vsyncpa %s17, 0
    %19 = vsyncpa [#allocation9], 0
    %20 = vsyncpa [#allocation4], 0
    %s21 = scalar_lea.sflag [#allocation4], 1
    %22 = vsyncpa %s21, 0
    loop: start=0, step=1, limit=4
    $region2: #{tpu_custom_call.1} parent=1 // loop_pre_header
      _
    $region3: #{tpu_custom_call.1} parent=1 // loop_header
      %s24 = sphi 0, %s28
      %p25 = scmp.ge.s32.totalorder %s24, 4
      %s34 = sphi 0, %s36
      %s37 = sphi 0, %s34
      %s38 = sphi 0, %s37
      %s54 = sphi 0, %s38
      %s60 = sphi 0, %s62
      %s63 = sphi 0, %s60
      %s64 = sphi 0, %s63
      %s80 = sphi 0, %s64
      %s84 = sphi 0, %s84
      %s86 = sphi 0, %s84
      %s87 = sphi 0, %s86
      %s101 = sphi 0, %s87
      %s105 = sphi 0, %s105
      %s107 = sphi 0, %s105
      %s108 = sphi 0, %s107
      %s122 = sphi 0, %s108
      %s126 = sphi 0, %s126
      %s128 = sphi 0, %s126
      %s129 = sphi 0, %s128
      %s143 = sphi 0, %s129
      %s147 = sphi 0, %s147
      %s149 = sphi 0, %s147
      %s150 = sphi 0, %s149
      %s164 = sphi 0, %s150
      %s168 = sphi 0, %s168
      %s170 = sphi 0, %s168
      %s171 = sphi 0, %s170
      %s185 = sphi 0, %s171
      %s189 = sphi 0, %s189
      %s191 = sphi 0, %s189
      %s192 = sphi 0, %s191
      %s206 = sphi 0, %s192
      %s212 = sphi 0, %s214
      %s215 = sphi 0, %s212
      %s216 = sphi 0, %s215
      %s232 = sphi 0, %s216
    $region4: #{tpu_custom_call.1} parent=1 // loop_header_branch
      %27 = sbr.rel (%p25) target = $region8
    $region5: #{tpu_custom_call.1} parent=1 // loop_body
      %s29 = ssub.s32 %s24, 1
      %s30 = ssub.s32 %s24, 2
      %s31 = sadd.s32 %s24, 1
      %s32 = ssub.s32 %s24, %s31
      %p33 = scmp.eq.s32.totalorder %s32, 0
      %s35 = sadd.s32 %s34, 1
      %s36 = scalar_select %p33, %s34, %s35
      %p39 = pneg %p33
      %p40 = scmp.eq.s32.totalorder %s24, 1
      %p41 = por %p39, %p40
      %p42 = scmp.ne.s32.totalorder %s34, %s37
      %p43 = scmp.eq.s32.totalorder %s24, 0
      %p44 = por %p42, %p43
      %p45 = scmp.ne.s32.totalorder %s34, %s37
      %p46 = scmp.eq.s32.totalorder %s29, 1
      %p47 = por %p45, %p46
      %p48 = scmp.ne.s32.totalorder %s37, %s38
      %p49 = scmp.eq.s32.totalorder %s29, 0
      %p50 = por %p48, %p49
      %p51 = scmp.ne.s32.totalorder %s37, %s38
      %p52 = scmp.eq.s32.totalorder %s30, 1
      %p53 = por %p51, %p52
      %p55 = scmp.ne.s32.totalorder %s38, %s54
      %p56 = scmp.eq.s32.totalorder %s30, 0
      %p57 = por %p55, %p56
      %s58 = ssub.s32 %s24, %s31
      %p59 = scmp.eq.s32.totalorder %s58, 0
      %s61 = sadd.s32 %s60, 1
      %s62 = scalar_select %p59, %s60, %s61
      %p65 = pneg %p59
      %p66 = scmp.eq.s32.totalorder %s24, 1
      %p67 = por %p65, %p66
      %p68 = scmp.ne.s32.totalorder %s60, %s63
      %p69 = scmp.eq.s32.totalorder %s24, 0
      %p70 = por %p68, %p69
      %p71 = scmp.ne.s32.totalorder %s60, %s63
      %p72 = scmp.eq.s32.totalorder %s29, 1
      %p73 = por %p71, %p72
      %p74 = scmp.ne.s32.totalorder %s63, %s64
      %p75 = scmp.eq.s32.totalorder %s29, 0
      %p76 = por %p74, %p75
      %p77 = scmp.ne.s32.totalorder %s63, %s64
      %p78 = scmp.eq.s32.totalorder %s30, 1
      %p79 = por %p77, %p78
      %p81 = scmp.ne.s32.totalorder %s64, %s80
      %p82 = scmp.eq.s32.totalorder %s30, 0
      %p83 = por %p81, %p82
      %s85 = sadd.s32 %s84, 1
      %p88 = scmp.eq.s32.totalorder %s24, 1
      %p89 = scmp.ne.s32.totalorder %s84, %s86
      %p90 = scmp.eq.s32.totalorder %s24, 0
      %p91 = por %p89, %p90
      %p92 = scmp.ne.s32.totalorder %s84, %s86
      %p93 = scmp.eq.s32.totalorder %s29, 1
      %p94 = por %p92, %p93
      %p95 = scmp.ne.s32.totalorder %s86, %s87
      %p96 = scmp.eq.s32.totalorder %s29, 0
      %p97 = por %p95, %p96
      %p98 = scmp.ne.s32.totalorder %s86, %s87
      %p99 = scmp.eq.s32.totalorder %s30, 1
      %p100 = por %p98, %p99
      %p102 = scmp.ne.s32.totalorder %s87, %s101
      %p103 = scmp.eq.s32.totalorder %s30, 0
      %p104 = por %p102, %p103
      %s106 = sadd.s32 %s105, 1
      %p109 = scmp.eq.s32.totalorder %s24, 1
      %p110 = scmp.ne.s32.totalorder %s105, %s107
      %p111 = scmp.eq.s32.totalorder %s24, 0
      %p112 = por %p110, %p111
      %p113 = scmp.ne.s32.totalorder %s105, %s107
      %p114 = scmp.eq.s32.totalorder %s29, 1
      %p115 = por %p113, %p114
      %p116 = scmp.ne.s32.totalorder %s107, %s108
      %p117 = scmp.eq.s32.totalorder %s29, 0
      %p118 = por %p116, %p117
      %p119 = scmp.ne.s32.totalorder %s107, %s108
      %p120 = scmp.eq.s32.totalorder %s30, 1
      %p121 = por %p119, %p120
      %p123 = scmp.ne.s32.totalorder %s108, %s122
      %p124 = scmp.eq.s32.totalorder %s30, 0
      %p125 = por %p123, %p124
      %s127 = sadd.s32 %s126, 1
      %p130 = scmp.eq.s32.totalorder %s24, 1
      %p131 = scmp.ne.s32.totalorder %s126, %s128
      %p132 = scmp.eq.s32.totalorder %s24, 0
      %p133 = por %p131, %p132
      %p134 = scmp.ne.s32.totalorder %s126, %s128
      %p135 = scmp.eq.s32.totalorder %s29, 1
      %p136 = por %p134, %p135
      %p137 = scmp.ne.s32.totalorder %s128, %s129
      %p138 = scmp.eq.s32.totalorder %s29, 0
      %p139 = por %p137, %p138
      %p140 = scmp.ne.s32.totalorder %s128, %s129
      %p141 = scmp.eq.s32.totalorder %s30, 1
      %p142 = por %p140, %p141
      %p144 = scmp.ne.s32.totalorder %s129, %s143
      %p145 = scmp.eq.s32.totalorder %s30, 0
      %p146 = por %p144, %p145
      %s148 = sadd.s32 %s147, 1
      %p151 = scmp.eq.s32.totalorder %s24, 1
      %p152 = scmp.ne.s32.totalorder %s147, %s149
      %p153 = scmp.eq.s32.totalorder %s24, 0
      %p154 = por %p152, %p153
      %p155 = scmp.ne.s32.totalorder %s147, %s149
      %p156 = scmp.eq.s32.totalorder %s29, 1
      %p157 = por %p155, %p156
      %p158 = scmp.ne.s32.totalorder %s149, %s150
      %p159 = scmp.eq.s32.totalorder %s29, 0
      %p160 = por %p158, %p159
      %p161 = scmp.ne.s32.totalorder %s149, %s150
      %p162 = scmp.eq.s32.totalorder %s30, 1
      %p163 = por %p161, %p162
      %p165 = scmp.ne.s32.totalorder %s150, %s164
      %p166 = scmp.eq.s32.totalorder %s30, 0
      %p167 = por %p165, %p166
      %s169 = sadd.s32 %s168, 1
      %p172 = scmp.eq.s32.totalorder %s24, 1
      %p173 = scmp.ne.s32.totalorder %s168, %s170
      %p174 = scmp.eq.s32.totalorder %s24, 0
      %p175 = por %p173, %p174
      %p176 = scmp.ne.s32.totalorder %s168, %s170
      %p177 = scmp.eq.s32.totalorder %s29, 1
      %p178 = por %p176, %p177
      %p179 = scmp.ne.s32.totalorder %s170, %s171
      %p180 = scmp.eq.s32.totalorder %s29, 0
      %p181 = por %p179, %p180
      %p182 = scmp.ne.s32.totalorder %s170, %s171
      %p183 = scmp.eq.s32.totalorder %s30, 1
      %p184 = por %p182, %p183
      %p186 = scmp.ne.s32.totalorder %s171, %s185
      %p187 = scmp.eq.s32.totalorder %s30, 0
      %p188 = por %p186, %p187
      %s190 = sadd.s32 %s189, 1
      %p193 = scmp.eq.s32.totalorder %s24, 1
      %p194 = scmp.ne.s32.totalorder %s189, %s191
      %p195 = scmp.eq.s32.totalorder %s24, 0
      %p196 = por %p194, %p195
      %p197 = scmp.ne.s32.totalorder %s189, %s191
      %p198 = scmp.eq.s32.totalorder %s29, 1
      %p199 = por %p197, %p198
      %p200 = scmp.ne.s32.totalorder %s191, %s192
      %p201 = scmp.eq.s32.totalorder %s29, 0
      %p202 = por %p200, %p201
      %p203 = scmp.ne.s32.totalorder %s191, %s192
      %p204 = scmp.eq.s32.totalorder %s30, 1
      %p205 = por %p203, %p204
      %p207 = scmp.ne.s32.totalorder %s192, %s206
      %p208 = scmp.eq.s32.totalorder %s30, 0
      %p209 = por %p207, %p208
      %s210 = ssub.s32 %s24, %s31
      %p211 = scmp.eq.s32.totalorder %s210, 0
      %s213 = sadd.s32 %s212, 1
      %s214 = scalar_select %p211, %s212, %s213
      %p217 = pneg %p211
      %p218 = scmp.eq.s32.totalorder %s24, 1
      %p219 = por %p217, %p218
      %p220 = scmp.ne.s32.totalorder %s212, %s215
      %p221 = scmp.eq.s32.totalorder %s24, 0
      %p222 = por %p220, %p221
      %p223 = scmp.ne.s32.totalorder %s212, %s215
      %p224 = scmp.eq.s32.totalorder %s29, 1
      %p225 = por %p223, %p224
      %p226 = scmp.ne.s32.totalorder %s215, %s216
      %p227 = scmp.eq.s32.totalorder %s29, 0
      %p228 = por %p226, %p227
      %p229 = scmp.ne.s32.totalorder %s215, %s216
      %p230 = scmp.eq.s32.totalorder %s30, 1
      %p231 = por %p229, %p230
      %p233 = scmp.ne.s32.totalorder %s216, %s232
      %p234 = scmp.eq.s32.totalorder %s30, 0
      %p235 = por %p233, %p234
      %p236 = scmp.le.s32.totalorder 1, %s24
      %p237 = scmp.lt.s32.totalorder %s24, 3
      %p238 = pnand %p236, %p237
      %p239 = pneg %p238
      // Predicated region
      $region9: #{tpu_custom_call.1} parent=5 // pred_check
        _
      $region10: #{tpu_custom_call.1} parent=5 // pred_check_branch
        %241 = sbr.rel (%p238) target = $region12
      $region11: #{tpu_custom_call.1} parent=5 // pred_region
        %s242 = ssub.s32 %s24, 1
        // Predicated region
        $region13: #{tpu_custom_call.1} parent=11 // pred_check
          %p243 = pneg %p97
        $region14: #{tpu_custom_call.1} parent=11 // pred_check_branch
          %245 = sbr.rel (%p243) target = $region16
        $region15: #{tpu_custom_call.1} parent=11 // pred_region
          %s247 = ssub.s32 1024, 1024
          %248 = vsyncadd [#allocation6], %s247
          %s249 = sshll.u32 [#allocation7], 4
          %s250 = int_to_ptr.vmem [resolvable:$true] %s249
          %255 = dma.hbm_to_vmem [thread:$0]  %s2, 1024, %s250, [#allocation6], 64, 64, 4
        $region16: #{tpu_custom_call.1} parent=11 // pred_fallthru
          _
        // Predicated region
        $region17: #{tpu_custom_call.1} parent=11 // pred_check
          %p256 = pneg %p118
        $region18: #{tpu_custom_call.1} parent=11 // pred_check_branch
          %258 = sbr.rel (%p256) target = $region20
        $region19: #{tpu_custom_call.1} parent=11 // pred_region
          _
        $region20: #{tpu_custom_call.1} parent=11 // pred_fallthru
          _
        // Predicated region
        $region21: #{tpu_custom_call.1} parent=11 // pred_check
          %p259 = pneg %p139
        $region22: #{tpu_custom_call.1} parent=11 // pred_check_branch
          %261 = sbr.rel (%p259) target = $region24
        $region23: #{tpu_custom_call.1} parent=11 // pred_region
          %s263 = ssub.s32 1024, 1024
          %264 = vsyncadd [#allocation9], %s263
          %s265 = sshll.u32 [#allocation8], 4
          %s266 = int_to_ptr.vmem [resolvable:$true] %s265
          %271 = dma.hbm_to_vmem [thread:$0]  %s4, 1024, %s266, [#allocation9], 64, 64, 4
        $region24: #{tpu_custom_call.1} parent=11 // pred_fallthru
          _
        // Predicated region
        $region25: #{tpu_custom_call.1} parent=11 // pred_check
          %p272 = pneg %p160
        $region26: #{tpu_custom_call.1} parent=11 // pred_check_branch
          %274 = sbr.rel (%p272) target = $region28
        $region27: #{tpu_custom_call.1} parent=11 // pred_region
          _
        $region28: #{tpu_custom_call.1} parent=11 // pred_fallthru
          _
        // Predicated region
        $region29: #{tpu_custom_call.1} parent=11 // pred_check
          %p275 = pneg %p181
        $region30: #{tpu_custom_call.1} parent=11 // pred_check_branch
          %277 = sbr.rel (%p275) target = $region32
        $region31: #{tpu_custom_call.1} parent=11 // pred_region
          %s279 = ssub.s32 2048, 2048
          %280 = vsyncadd [#allocation9], %s279
          %s281 = sshll.u32 [#allocation10], 4
          %s282 = int_to_ptr.vmem [resolvable:$true] %s281
          %287 = dma.hbm_to_vmem [thread:$0]  %s6, 2048, %s282, [#allocation9], 128, 128, 8
        $region32: #{tpu_custom_call.1} parent=11 // pred_fallthru
          _
        // Predicated region
        $region33: #{tpu_custom_call.1} parent=11 // pred_check
          %p288 = pneg %p202
        $region34: #{tpu_custom_call.1} parent=11 // pred_check_branch
          %290 = sbr.rel (%p288) target = $region36
        $region35: #{tpu_custom_call.1} parent=11 // pred_region
          _
        $region36: #{tpu_custom_call.1} parent=11 // pred_fallthru
          _
      $region12: #{tpu_custom_call.1} parent=5 // pred_fallthru
        _
      %p291 = scmp.lt.s32.totalorder %s24, 2
      // Predicated region
      $region37: #{tpu_custom_call.1} parent=5 // pred_check
        %p292 = pneg %p291
      $region38: #{tpu_custom_call.1} parent=5 // pred_check_branch
        %294 = sbr.rel (%p292) target = $region40
      $region39: #{tpu_custom_call.1} parent=5 // pred_region
        // Predicated region
        $region41: #{tpu_custom_call.1} parent=39 // pred_check
          %p295 = pneg %p44
        $region42: #{tpu_custom_call.1} parent=39 // pred_check_branch
          %297 = sbr.rel (%p295) target = $region44
        $region43: #{tpu_custom_call.1} parent=39 // pred_region
          %s298 = sand.u32 %s34, 1
          %s299 = scalar_lea.sflag [#allocation3], %s298
          %s300 = sand.u32 %s34, 1
          %s301 = smul.addr %s300, 4
          %s302 = scalar_lea.vmem [#allocation2], %s301
          %s304 = ssub.s32 64, 64
          %305 = vsyncadd %s299, %s304
          %s306 = smul.addr %s24, 64
          %s307 = scalar_lea.hbm %s0, %s306
          %s309 = sshll.u32 %s302, 4
          %s310 = int_to_ptr.vmem [resolvable:$true] %s309
          %312 = dma.hbm_to_vmem [thread:$0]  %s307, 64, %s310, %s299
        $region44: #{tpu_custom_call.1} parent=39 // pred_fallthru
          _
        // Predicated region
        $region45: #{tpu_custom_call.1} parent=39 // pred_check
          %p313 = pneg %p70
        $region46: #{tpu_custom_call.1} parent=39 // pred_check_branch
          %315 = sbr.rel (%p313) target = $region48
        $region47: #{tpu_custom_call.1} parent=39 // pred_region
          %s316 = sand.u32 %s24, 1
          %s317 = scalar_lea.sflag [#allocation6], %s316
          %s318 = sand.u32 %s60, 1
          %s319 = smul.addr %s318, 8
          %s320 = scalar_lea.vmem [#allocation5], %s319
          %s322 = ssub.s32 128, 128
          %323 = vsyncadd %s317, %s322
          %s324 = smul.addr %s24, 128
          %s325 = scalar_lea.hbm %s1, %s324
          %s327 = sshll.u32 %s320, 4
          %s328 = int_to_ptr.vmem [resolvable:$true] %s327
          %330 = dma.hbm_to_vmem [thread:$0]  %s325, 128, %s328, %s317
        $region48: #{tpu_custom_call.1} parent=39 // pred_fallthru
          _
      $region40: #{tpu_custom_call.1} parent=5 // pred_fallthru
        _
      %p331 = scmp.le.s32.totalorder 1, %s24
      %p332 = scmp.lt.s32.totalorder %s24, 3
      %p333 = pnand %p331, %p332
      %p334 = pneg %p333
      // Predicated region
      $region49: #{tpu_custom_call.1} parent=5 // pred_check
        _
      $region50: #{tpu_custom_call.1} parent=5 // pred_check_branch
        %336 = sbr.rel (%p333) target = $region52
      $region51: #{tpu_custom_call.1} parent=5 // pred_region
        %s337 = ssub.s32 %s24, 1
        %s338 = sand.u32 %s37, 1
        %s339 = scalar_lea.sflag [#allocation3], %s338
        %s340 = sand.u32 %s37, 1
        %s341 = smul.addr %s340, 4
        %s342 = scalar_lea.vmem [#allocation2], %s341
        // Predicated region
        $region53: #{tpu_custom_call.1} parent=51 // pred_check
          %p343 = pneg %p50
        $region54: #{tpu_custom_call.1} parent=51 // pred_check_branch
          %345 = sbr.rel (%p343) target = $region56
        $region55: #{tpu_custom_call.1} parent=51 // pred_region
          %346 = dma.done %s339, 64
        $region56: #{tpu_custom_call.1} parent=51 // pred_fallthru
          _
        %s347 = sand.u32 %s29, 1
        %s348 = scalar_lea.sflag [#allocation6], %s347
        %s349 = sand.u32 %s63, 1
        %s350 = smul.addr %s349, 8
        %s351 = scalar_lea.vmem [#allocation5], %s350
        // Predicated region
        $region57: #{tpu_custom_call.1} parent=51 // pred_check
          %p352 = pneg %p76
        $region58: #{tpu_custom_call.1} parent=51 // pred_check_branch
          %354 = sbr.rel (%p352) target = $region60
        $region59: #{tpu_custom_call.1} parent=51 // pred_region
          %355 = dma.done %s348, 128
        $region60: #{tpu_custom_call.1} parent=51 // pred_fallthru
          _
        // Predicated region
        $region61: #{tpu_custom_call.1} parent=51 // pred_check
          %p356 = pneg %p97
        $region62: #{tpu_custom_call.1} parent=51 // pred_check_branch
          %358 = sbr.rel (%p356) target = $region64
        $region63: #{tpu_custom_call.1} parent=51 // pred_region
          %359 = dma.done [#allocation6], 1024
        $region64: #{tpu_custom_call.1} parent=51 // pred_fallthru
          _
        // Predicated region
        $region65: #{tpu_custom_call.1} parent=51 // pred_check
          %p360 = pneg %p139
        $region66: #{tpu_custom_call.1} parent=51 // pred_check_branch
          %362 = sbr.rel (%p360) target = $region68
        $region67: #{tpu_custom_call.1} parent=51 // pred_region
          %363 = dma.done [#allocation9], 1024
        $region68: #{tpu_custom_call.1} parent=51 // pred_fallthru
          _
        // Predicated region
        $region69: #{tpu_custom_call.1} parent=51 // pred_check
          %p364 = pneg %p181
        $region70: #{tpu_custom_call.1} parent=51 // pred_check_branch
          %366 = sbr.rel (%p364) target = $region72
        $region71: #{tpu_custom_call.1} parent=51 // pred_region
          %367 = dma.done [#allocation9], 2048
        $region72: #{tpu_custom_call.1} parent=51 // pred_fallthru
          _
        %s368 = sand.u32 %s37, 1
        %s369 = scalar_lea.sflag [#allocation3], %s368
        %s370 = sand.u32 %s37, 1
        %s371 = smul.addr %s370, 4
        %s372 = scalar_lea.vmem [#allocation2], %s371
        %p373 = pneg %p50
        %p374 = pneg %p47
        %s375 = sand.u32 %s29, 1
        %s376 = scalar_lea.sflag [#allocation6], %s375
        %s377 = sand.u32 %s63, 1
        %s378 = smul.addr %s377, 8
        %s379 = scalar_lea.vmem [#allocation5], %s378
        %p380 = pneg %p76
        %p381 = pneg %p73
        %p382 = pneg %p97
        %p383 = pneg %p94
        %p384 = pneg %p118
        %p385 = pneg %p115
        %p386 = pneg %p139
        %p387 = pneg %p136
        %p388 = pneg %p160
        %p389 = pneg %p157
        %p390 = pneg %p181
        %p391 = pneg %p178
        %p392 = pneg %p202
        %p393 = pneg %p199
        %p394 = pneg %p228
        %p395 = pneg %p225
        %s396 = sand.u32 %s215, 1
        %s397 = scalar_lea.sflag [#allocation4], %s396
        %s398 = sand.u32 %s215, 1
        %s399 = smul.addr %s398, 8
        %s400 = scalar_lea.vmem [#allocation11], %s399
        %v402 = vld [vmem:[%s342] sm:$0xf]
        %v403 = vld [vmem:[#allocation7] sm:$0xf]
        %v404 = vld [vmem:[#allocation7 + $0x4] sm:$0xf]
        %v405 = vld [vmem:[#allocation7 + $0x8] sm:$0xf]
        %v406 = vld [vmem:[#allocation7 + $0xc] sm:$0xf]
        %v407 = vld [vmem:[#allocation7 + $0x10] sm:$0xf]
        %v408 = vld [vmem:[#allocation7 + $0x14] sm:$0xf]
        %v409 = vld [vmem:[#allocation7 + $0x18] sm:$0xf]
        %v410 = vld [vmem:[#allocation7 + $0x1c] sm:$0xf]
        %v411 = vld [vmem:[#allocation7 + $0x20] sm:$0xf]
        %v412 = vld [vmem:[#allocation7 + $0x24] sm:$0xf]
        %v413 = vld [vmem:[#allocation7 + $0x28] sm:$0xf]
        %v414 = vld [vmem:[#allocation7 + $0x2c] sm:$0xf]
        %v415 = vld [vmem:[#allocation7 + $0x30] sm:$0xf]
        %v416 = vld [vmem:[#allocation7 + $0x34] sm:$0xf]
        %v417 = vld [vmem:[#allocation7 + $0x38] sm:$0xf]
        %v418 = vld [vmem:[#allocation7 + $0x3c] sm:$0xf]
        %v419 = vld [vmem:[%s3] sm:$0x1]
        %v421 = vlaneseq
        %v422 = vshrl.u32 %v421, 7
        %v423 = vsub.s32 0, %v422
        %v424 = vrot.slane %v419, %v423
        %v442 = vunpack.c.l.b16 %v403
        %v443 = vunpack.c.l.b16 %v404
        %v444 = vunpack.c.l.b16 %v405
        %v445 = vunpack.c.l.b16 %v406
        %v446 = vunpack.c.l.b16 %v407
        %v447 = vunpack.c.l.b16 %v408
        %v448 = vunpack.c.l.b16 %v409
        %v449 = vunpack.c.l.b16 %v410
        %v450 = vunpack.c.l.b16 %v411
        %v451 = vunpack.c.l.b16 %v412
        %v452 = vunpack.c.l.b16 %v413
        %v453 = vunpack.c.l.b16 %v414
        %v454 = vunpack.c.l.b16 %v415
        %v455 = vunpack.c.l.b16 %v416
        %v456 = vunpack.c.l.b16 %v417
        %v457 = vunpack.c.l.b16 %v418
        %v458 = vpack.c.b16 %v443, %v442
        %v459 = vpack.c.b16 %v445, %v444
        %v460 = vpack.c.b16 %v447, %v446
        %v461 = vpack.c.b16 %v449, %v448
        %v462 = vpack.c.b16 %v451, %v450
        %v463 = vpack.c.b16 %v453, %v452
        %v464 = vpack.c.b16 %v455, %v454
        %v465 = vpack.c.b16 %v457, %v456
        %474 = vmatprep.subr.bf16.mxu0 0
        %475 = vmatpush1.bf16.msra.mxu0 %v458
        %476 = vmatprep.subr.bf16.mxu0 0
        %477 = vmatpush1.bf16.msra.mxu0 %v459
        %478 = vmatprep.subr.bf16.mxu0 0
        %479 = vmatpush1.bf16.msra.mxu0 %v460
        %480 = vmatprep.subr.bf16.mxu0 0
        %481 = vmatpush1.bf16.msra.mxu0 %v461
        %482 = vmatprep.subr.bf16.mxu0 0
        %483 = vmatpush1.bf16.msra.mxu0 %v462
        %484 = vmatprep.subr.bf16.mxu0 0
        %485 = vmatpush1.bf16.msra.mxu0 %v463
        %486 = vmatprep.subr.bf16.mxu0 0
        %487 = vmatpush1.bf16.msra.mxu0 %v464
        %488 = vmatprep.subr.bf16.mxu0 0
        %489 = vmatpush1.bf16.msra.mxu0 %v465
        %490 = vmatprep.subr.bf16.mxu0 0
        %491 = vmatpush1.bf16.msra.mxu0 0
        %492 = vmatprep.subr.bf16.mxu0 0
        %493 = vmatpush1.bf16.msra.mxu0 0
        %494 = vmatprep.subr.bf16.mxu0 0
        %495 = vmatpush1.bf16.msra.mxu0 0
        %496 = vmatprep.subr.bf16.mxu0 0
        %497 = vmatpush1.bf16.msra.mxu0 0
        %498 = vmatprep.subr.bf16.mxu0 0
        %499 = vmatpush1.bf16.msra.mxu0 0
        %500 = vmatprep.subr.bf16.mxu0 0
        %501 = vmatpush1.bf16.msra.mxu0 0
        %502 = vmatprep.subr.bf16.mxu0 0
        %503 = vmatpush1.bf16.msra.mxu0 0
        %504 = vmatprep.subr.bf16.mxu0 0
        %505 = vmatpush1.bf16.msra.mxu0 0
        %506 = vmatprep.mubr.bf16.mxu0 0
        %507 = vmatmul.mubr.bf16.gmra.mrb[0].mxu0 %v402
        %v508 = vpop.f32.mrb[0].mxu0
        %v509 = vadd.f32 %v424, %v508
        %v510 = vpop.f32.mrb[0].mxu0
        %v511 = vpop.f32.mrb[0].mxu0
        %v512 = vpop.f32.mrb[0].mxu0
        %513 = vdwg.mxu0
        %v514 = vmul.f32 %v509, 0.2
        %v515 = vmax.f32 %v509, %v514
        %v516 = vpack.c.bf16 %v515, %v515
        %v517 = vld [vmem:[#allocation8] sm:$0xf]
        %v518 = vld [vmem:[#allocation8 + $0x4] sm:$0xf]
        %v519 = vld [vmem:[#allocation8 + $0x8] sm:$0xf]
        %v520 = vld [vmem:[#allocation8 + $0xc] sm:$0xf]
        %v521 = vld [vmem:[#allocation8 + $0x10] sm:$0xf]
        %v522 = vld [vmem:[#allocation8 + $0x14] sm:$0xf]
        %v523 = vld [vmem:[#allocation8 + $0x18] sm:$0xf]
        %v524 = vld [vmem:[#allocation8 + $0x1c] sm:$0xf]
        %v525 = vld [vmem:[#allocation8 + $0x20] sm:$0xf]
        %v526 = vld [vmem:[#allocation8 + $0x24] sm:$0xf]
        %v527 = vld [vmem:[#allocation8 + $0x28] sm:$0xf]
        %v528 = vld [vmem:[#allocation8 + $0x2c] sm:$0xf]
        %v529 = vld [vmem:[#allocation8 + $0x30] sm:$0xf]
        %v530 = vld [vmem:[#allocation8 + $0x34] sm:$0xf]
        %v531 = vld [vmem:[#allocation8 + $0x38] sm:$0xf]
        %v532 = vld [vmem:[#allocation8 + $0x3c] sm:$0xf]
        %v533 = vld [vmem:[%s5] sm:$0x1]
        %v535 = vlaneseq
        %v536 = vshrl.u32 %v535, 7
        %v537 = vsub.s32 0, %v536
        %v538 = vrot.slane %v533, %v537
        %v556 = vunpack.c.l.b16 %v517
        %v557 = vunpack.c.l.b16 %v518
        %v558 = vunpack.c.l.b16 %v519
        %v559 = vunpack.c.l.b16 %v520
        %v560 = vunpack.c.l.b16 %v521
        %v561 = vunpack.c.l.b16 %v522
        %v562 = vunpack.c.l.b16 %v523
        %v563 = vunpack.c.l.b16 %v524
        %v564 = vunpack.c.l.b16 %v525
        %v565 = vunpack.c.l.b16 %v526
        %v566 = vunpack.c.l.b16 %v527
        %v567 = vunpack.c.l.b16 %v528
        %v568 = vunpack.c.l.b16 %v529
        %v569 = vunpack.c.l.b16 %v530
        %v570 = vunpack.c.l.b16 %v531
        %v571 = vunpack.c.l.b16 %v532
        %v572 = vpack.c.b16 %v557, %v556
        %v573 = vpack.c.b16 %v559, %v558
        %v574 = vpack.c.b16 %v561, %v560
        %v575 = vpack.c.b16 %v563, %v562
        %v576 = vpack.c.b16 %v565, %v564
        %v577 = vpack.c.b16 %v567, %v566
        %v578 = vpack.c.b16 %v569, %v568
        %v579 = vpack.c.b16 %v571, %v570
        %588 = vmatprep.subr.bf16.mxu0 0
        %589 = vmatpush1.bf16.msra.mxu0 %v572
        %590 = vmatprep.subr.bf16.mxu0 0
        %591 = vmatpush1.bf16.msra.mxu0 %v573
        %592 = vmatprep.subr.bf16.mxu0 0
        %593 = vmatpush1.bf16.msra.mxu0 %v574
        %594 = vmatprep.subr.bf16.mxu0 0
        %595 = vmatpush1.bf16.msra.mxu0 %v575
        %596 = vmatprep.subr.bf16.mxu0 0
        %597 = vmatpush1.bf16.msra.mxu0 %v576
        %598 = vmatprep.subr.bf16.mxu0 0
        %599 = vmatpush1.bf16.msra.mxu0 %v577
        %600 = vmatprep.subr.bf16.mxu0 0
        %601 = vmatpush1.bf16.msra.mxu0 %v578
        %602 = vmatprep.subr.bf16.mxu0 0
        %603 = vmatpush1.bf16.msra.mxu0 %v579
        %604 = vmatprep.subr.bf16.mxu0 0
        %605 = vmatpush1.bf16.msra.mxu0 0
        %606 = vmatprep.subr.bf16.mxu0 0
        %607 = vmatpush1.bf16.msra.mxu0 0
        %608 = vmatprep.subr.bf16.mxu0 0
        %609 = vmatpush1.bf16.msra.mxu0 0
        %610 = vmatprep.subr.bf16.mxu0 0
        %611 = vmatpush1.bf16.msra.mxu0 0
        %612 = vmatprep.subr.bf16.mxu0 0
        %613 = vmatpush1.bf16.msra.mxu0 0
        %614 = vmatprep.subr.bf16.mxu0 0
        %615 = vmatpush1.bf16.msra.mxu0 0
        %616 = vmatprep.subr.bf16.mxu0 0
        %617 = vmatpush1.bf16.msra.mxu0 0
        %618 = vmatprep.subr.bf16.mxu0 0
        %619 = vmatpush1.bf16.msra.mxu0 0
        %620 = vmatprep.mubr.bf16.mxu0 0
        %621 = vmatmul.mubr.bf16.gmra.mrb[0].mxu0 %v516
        %v622 = vpop.f32.mrb[0].mxu0
        %v623 = vadd.f32 %v538, %v622
        %v624 = vpop.f32.mrb[0].mxu0
        %v625 = vpop.f32.mrb[0].mxu0
        %v626 = vpop.f32.mrb[0].mxu0
        %627 = vdwg.mxu0
        %v628 = vpack.c.bf16 %v623, %v623
        %v629 = vld [vmem:[#allocation10] sm:$0xff]
        %v630 = vld [vmem:[#allocation10 + $0x8] sm:$0xff]
        %v631 = vld [vmem:[#allocation10 + $0x10] sm:$0xff]
        %v632 = vld [vmem:[#allocation10 + $0x18] sm:$0xff]
        %v633 = vld [vmem:[#allocation10 + $0x20] sm:$0xff]
        %v634 = vld [vmem:[#allocation10 + $0x28] sm:$0xff]
        %v635 = vld [vmem:[#allocation10 + $0x30] sm:$0xff]
        %v636 = vld [vmem:[#allocation10 + $0x38] sm:$0xff]
        %v637 = vld [vmem:[#allocation10 + $0x40] sm:$0xff]
        %v638 = vld [vmem:[#allocation10 + $0x48] sm:$0xff]
        %v639 = vld [vmem:[#allocation10 + $0x50] sm:$0xff]
        %v640 = vld [vmem:[#allocation10 + $0x58] sm:$0xff]
        %v641 = vld [vmem:[#allocation10 + $0x60] sm:$0xff]
        %v642 = vld [vmem:[#allocation10 + $0x68] sm:$0xff]
        %v643 = vld [vmem:[#allocation10 + $0x70] sm:$0xff]
        %v644 = vld [vmem:[#allocation10 + $0x78] sm:$0xff]
        %v645 = vld [vmem:[%s7] sm:$0x3]
        %v647 = vlaneseq
        %v648 = vshrl.u32 %v647, 7
        %v649 = vsub.s32 0, %v648
        %v650 = vrot.slane %v645, %v649
        %v651 = vlaneseq
        %v652 = vshrl.u32 %v651, 7
        %v653 = vsub.s32 1, %v652
        %v654 = vrot.slane %v645, %v653
        %v673 = vunpack.c.l.b16 %v629
        %v674 = vunpack.c.h.b16 %v629
        %v675 = vunpack.c.l.b16 %v630
        %v676 = vunpack.c.h.b16 %v630
        %v677 = vunpack.c.l.b16 %v631
        %v678 = vunpack.c.h.b16 %v631
        %v679 = vunpack.c.l.b16 %v632
        %v680 = vunpack.c.h.b16 %v632
        %v681 = vunpack.c.l.b16 %v633
        %v682 = vunpack.c.h.b16 %v633
        %v683 = vunpack.c.l.b16 %v634
        %v684 = vunpack.c.h.b16 %v634
        %v685 = vunpack.c.l.b16 %v635
        %v686 = vunpack.c.h.b16 %v635
        %v687 = vunpack.c.l.b16 %v636
        %v688 = vunpack.c.h.b16 %v636
        %v689 = vunpack.c.l.b16 %v637
        %v690 = vunpack.c.h.b16 %v637
        %v691 = vunpack.c.l.b16 %v638
        %v692 = vunpack.c.h.b16 %v638
        %v693 = vunpack.c.l.b16 %v639
        %v694 = vunpack.c.h.b16 %v639
        %v695 = vunpack.c.l.b16 %v640
        %v696 = vunpack.c.h.b16 %v640
        %v697 = vunpack.c.l.b16 %v641
        %v698 = vunpack.c.h.b16 %v641
        %v699 = vunpack.c.l.b16 %v642
        %v700 = vunpack.c.h.b16 %v642
        %v701 = vunpack.c.l.b16 %v643
        %v702 = vunpack.c.h.b16 %v643
        %v703 = vunpack.c.l.b16 %v644
        %v704 = vunpack.c.h.b16 %v644
        %v705 = vpack.c.b16 %v675, %v673
        %v706 = vpack.c.b16 %v676, %v674
        %v707 = vpack.c.b16 %v679, %v677
        %v708 = vpack.c.b16 %v680, %v678
        %v709 = vpack.c.b16 %v683, %v681
        %v710 = vpack.c.b16 %v684, %v682
        %v711 = vpack.c.b16 %v687, %v685
        %v712 = vpack.c.b16 %v688, %v686
        %v713 = vpack.c.b16 %v691, %v689
        %v714 = vpack.c.b16 %v692, %v690
        %v715 = vpack.c.b16 %v695, %v693
        %v716 = vpack.c.b16 %v696, %v694
        %v717 = vpack.c.b16 %v699, %v697
        %v718 = vpack.c.b16 %v700, %v698
        %v719 = vpack.c.b16 %v703, %v701
        %v720 = vpack.c.b16 %v704, %v702
        %737 = vmatprep.subr.bf16.mxu0 %v706
        %738 = vmatpush1.bf16.msra.mxu0 %v705
        %739 = vmatprep.subr.bf16.mxu0 %v708
        %740 = vmatpush1.bf16.msra.mxu0 %v707
        %741 = vmatprep.subr.bf16.mxu0 %v710
        %742 = vmatpush1.bf16.msra.mxu0 %v709
        %743 = vmatprep.subr.bf16.mxu0 %v712
        %744 = vmatpush1.bf16.msra.mxu0 %v711
        %745 = vmatprep.subr.bf16.mxu0 %v714
        %746 = vmatpush1.bf16.msra.mxu0 %v713
        %747 = vmatprep.subr.bf16.mxu0 %v716
        %748 = vmatpush1.bf16.msra.mxu0 %v715
        %749 = vmatprep.subr.bf16.mxu0 %v718
        %750 = vmatpush1.bf16.msra.mxu0 %v717
        %751 = vmatprep.subr.bf16.mxu0 %v720
        %752 = vmatpush1.bf16.msra.mxu0 %v719
        %753 = vmatprep.subr.bf16.mxu0 0
        %754 = vmatpush1.bf16.msra.mxu0 0
        %755 = vmatprep.subr.bf16.mxu0 0
        %756 = vmatpush1.bf16.msra.mxu0 0
        %757 = vmatprep.subr.bf16.mxu0 0
        %758 = vmatpush1.bf16.msra.mxu0 0
        %759 = vmatprep.subr.bf16.mxu0 0
        %760 = vmatpush1.bf16.msra.mxu0 0
        %761 = vmatprep.subr.bf16.mxu0 0
        %762 = vmatpush1.bf16.msra.mxu0 0
        %763 = vmatprep.subr.bf16.mxu0 0
        %764 = vmatpush1.bf16.msra.mxu0 0
        %765 = vmatprep.subr.bf16.mxu0 0
        %766 = vmatpush1.bf16.msra.mxu0 0
        %767 = vmatprep.subr.bf16.mxu0 0
        %768 = vmatpush1.bf16.msra.mxu0 0
        %769 = vmatprep.mubr.bf16.mxu0 0
        %770 = vmatmul.mubr.bf16.gmra.mrb[0].mxu0 %v628
        %v771 = vpop.f32.mrb[0].mxu0
        %v772 = vadd.f32 %v650, %v771
        %v773 = vpop.f32.mrb[0].mxu0
        %v774 = vadd.f32 %v654, %v773
        %v775 = vpop.f32.mrb[0].mxu0
        %v776 = vpop.f32.mrb[0].mxu0
        %777 = vdwg.mxu0
        %v778 = vand.u32 2147483647, %v772
        %v779 = vsub.f32 0.0, %v778
        %v780 = vmul.f32 %v779, 1.442695
        %v781 = vpow.pop %v780
        %v782 = vadd.f32 %v781, 1.0
        %v783 = vrcp.pop %v782
        %vm784 = vcmp.ge.f32.partialorder %v772, 0.0
        %v785 = vmul.f32 %v781, %v783
        %v786 = vsel %vm784, %v783, %v785
        %v787 = vld [vmem:[%s351] sm:$0xff]
        %v788 = vmul.f32 %v786, %v787
        %v789 = vadd.f32 %v788, %v774
        %790 = vst [vmem:[%s400] sm:$0xff] %v789
        %s791 = sand.u32 %s215, 1
        %s792 = scalar_lea.sflag [#allocation4], %s791
        %s793 = sand.u32 %s215, 1
        %s794 = smul.addr %s793, 8
        %s795 = scalar_lea.vmem [#allocation11], %s794
        // Predicated region
        $region73: #{tpu_custom_call.1} parent=51 // pred_check
          %p796 = pneg %p225
        $region74: #{tpu_custom_call.1} parent=51 // pred_check_branch
          %798 = sbr.rel (%p796) target = $region76
        $region75: #{tpu_custom_call.1} parent=51 // pred_region
          %s800 = ssub.s32 128, 128
          %801 = vsyncadd %s792, %s800
          %s802 = smul.addr %s29, 128
          %s803 = scalar_lea.hbm %s8, %s802
          %s805 = sshll.u32 %s795, 4
          %s806 = int_to_ptr.vmem [resolvable:$true] %s805
          %808 = dma.vmem_to_hbm [thread:$0]  %s806, 128, %s803, %s792
        $region76: #{tpu_custom_call.1} parent=51 // pred_fallthru
          _
      $region52: #{tpu_custom_call.1} parent=5 // pred_fallthru
        _
      %p809 = scmp.le.s32.totalorder 2, %s24
      // Predicated region
      $region77: #{tpu_custom_call.1} parent=5 // pred_check
        %p810 = pneg %p809
      $region78: #{tpu_custom_call.1} parent=5 // pred_check_branch
        %812 = sbr.rel (%p810) target = $region80
      $region79: #{tpu_custom_call.1} parent=5 // pred_region
        %s813 = ssub.s32 %s24, 2
        // Predicated region
        $region81: #{tpu_custom_call.1} parent=79 // pred_check
          %p814 = pneg %p231
        $region82: #{tpu_custom_call.1} parent=79 // pred_check_branch
          %816 = sbr.rel (%p814) target = $region84
        $region83: #{tpu_custom_call.1} parent=79 // pred_region
          %s817 = sand.u32 %s216, 1
          %s818 = scalar_lea.sflag [#allocation4], %s817
          %s819 = sand.u32 %s216, 1
          %s820 = smul.addr %s819, 8
          %s821 = scalar_lea.vmem [#allocation11], %s820
          %822 = dma.done %s818, 128
        $region84: #{tpu_custom_call.1} parent=79 // pred_fallthru
          _
      $region80: #{tpu_custom_call.1} parent=5 // pred_fallthru
        _
    $region6: #{tpu_custom_call.1} parent=1 // loop_footer
      %s28 = sadd.s32 1, %s24
    $region7: #{tpu_custom_call.1} parent=1 // loop_footer_branch
      %23 = sbr.rel target = $region3
    $region8: #{tpu_custom_call.1} parent=1 // loop_exit
      _
    %823 = vsyncpa [#allocation3], 1
    %s824 = scalar_lea.sflag [#allocation3], 1
    %825 = vsyncpa %s824, 1
    %826 = vsyncpa [#allocation6], 1
    %s827 = scalar_lea.sflag [#allocation6], 1
    %828 = vsyncpa %s827, 1
    %829 = vsyncpa [#allocation9], 1
    %830 = vsyncpa [#allocation4], 1
    %s831 = scalar_lea.sflag [#allocation4], 1
    %832 = vsyncpa %s831, 1

</llo_original>
